<compile_context>
chip_gen: v7x
topology: tpu7x:2x2x1
jax: 0.10.0
libtpu: 0.0.40
codegen_flags: <defaults>
</compile_context>

<pallas_src>
import jax
import jax.numpy as jnp
from jax.experimental import pallas as pl
from jax.experimental.pallas import tpu as pltpu


def _round_up(x, m):
    return (x + m - 1) // m * m


def _pad_hidden(h):
    # v6e/v7x MXU is 2x256^2: keep the hidden (output-lane) dim a multiple of
    # 256 so no MXU output lanes idle; tiny configs round to one 128-lane tile.
    return 128 if h <= 128 else _round_up(h, 256)


def _choose_tb(batch, *, max_block_b=2048, min_tiles=2):
    """Pick the batch tile (multiple of 128).

    Per-grid-step overhead (~0.35us) dominates at SAC shapes, so prefer few,
    large tiles; but keep >= `min_tiles` balanced tiles when possible so both
    v7x TensorCores get work; for many-tile cases pick the tile that minimizes
    wasted padded rows.
    """
    pb = _round_up(max(batch, 1), 128)
    if pb <= 128:
        return 128                                   # can't split below 128
    if pb <= min_tiles * max_block_b:
        return _round_up(-(-pb // min_tiles), 128)    # 2 balanced tiles
    best_tb, best_pad = 128, None
    for tb in range(max_block_b, 127, -128):          # largest first
        pad = _round_up(pb, tb) - pb
        if best_pad is None or pad < best_pad:
            best_tb, best_pad = tb, pad
        if best_pad == 0:
            break
    return best_tb


def _softq_kernel(x_ref, w1_ref, b1_ref, w2_ref, b2_ref, w3_ref, b3_ref, o_ref):
    # x_ref : (TB, Din)  f32   (state ++ action, concatenated in the wrapper)
    # w1_ref: (Din, Hp)  bf16
    # b1_ref: (1, Hp)    f32
    # w2_ref: (Hp, Hp)   bf16
    # b2_ref: (1, Hp)    f32
    # w3_ref: (Hp, 1)    bf16  (column form of linear3.weight)
    # b3_ref: (1, 1)     f32   (SMEM scalar)
    # o_ref : (TB, 1)    f32
    x = x_ref[...].astype(jnp.bfloat16)

    # Layer 1: single K=Din matmul, f32 accumulate; bias+ReLU+downcast fused so
    # only the bf16 activation is bound.
    h1 = jnp.maximum(
        jnp.dot(x, w1_ref[...], preferred_element_type=jnp.float32) + b1_ref[...],
        0.0).astype(jnp.bfloat16)

    # Layer 2.
    h2 = jnp.maximum(
        jnp.dot(h1, w2_ref[...], preferred_element_type=jnp.float32) + b2_ref[...],
        0.0).astype(jnp.bfloat16)

    # Layer 3 (Hp -> 1): plain (TB,Hp)x(Hp,1) matmul -- no hidden h2 transpose.
    q = jnp.dot(h2, w3_ref[...], preferred_element_type=jnp.float32)  # (TB, 1)
    o_ref[...] = (q + b3_ref[0, 0]).astype(o_ref.dtype)


def soft_q_forward(state, action, params, *, max_block_b=2048):
    """state: (B, num_inputs), action: (B, num_actions) -> (B, 1) float32."""
    w1, b1, w2, b2, w3, b3 = params
    state = state.astype(jnp.float32)
    action = action.astype(jnp.float32)

    B, n_in = state.shape
    _, n_act = action.shape
    din = n_in + n_act
    H = w2.shape[0]
    Hp = _pad_hidden(H)

    # Zero-pad hidden dim (exact no-op numerically: padded h columns are
    # relu(0)=0 and padded w2 rows / w3 rows are 0).
    if Hp != H:
        w1 = jnp.pad(w1, ((0, 0), (0, Hp - H)))
        b1 = jnp.pad(b1, ((0, 0), (0, Hp - H)))
        w2 = jnp.pad(w2, ((0, Hp - H), (0, Hp - H)))
        b2 = jnp.pad(b2, ((0, 0), (0, Hp - H)))
        w3 = jnp.pad(w3, ((0, Hp - H), (0, 0)))

    # Fused "concat": build the (B, Din) input once in the wrapper (tiny copy,
    # fuses with the batch pad) so layer 1 is a single MXU matmul.
    x = jnp.concatenate([state, action], axis=1)

    tb = _choose_tb(B, max_block_b=max_block_b)
    padded_B = _round_up(max(B, 1), tb)
    n_tiles = padded_B // tb
    if padded_B != B:
        x = jnp.pad(x, ((0, padded_B - B), (0, 0)))

    grid_spec = pltpu.PrefetchScalarGridSpec(
        num_scalar_prefetch=0,
        grid=(n_tiles,),
        in_specs=[
            pl.BlockSpec((tb, din), lambda i: (i, 0)),           # x tile
            pl.BlockSpec((din, Hp), lambda i: (0, 0)),           # w1 (VMEM-resident)
            pl.BlockSpec((1, Hp), lambda i: (0, 0)),             # b1
            pl.BlockSpec((Hp, Hp), lambda i: (0, 0)),            # w2
            pl.BlockSpec((1, Hp), lambda i: (0, 0)),             # b2
            pl.BlockSpec((Hp, 1), lambda i: (0, 0)),             # w3 column
            pl.BlockSpec(memory_space=pltpu.MemorySpace.SMEM),   # b3 scalar
        ],
        out_specs=pl.BlockSpec((tb, 1), lambda i: (i, 0)),
    )

    out = pl.pallas_call(
        _softq_kernel,
        out_shape=jax.ShapeDtypeStruct((padded_B, 1), jnp.float32),
        grid_spec=grid_spec,
        compiler_params=pltpu.CompilerParams(
            dimension_semantics=("parallel",),      # megacore split on v7x
            vmem_limit_bytes=48 * 1024 * 1024,      # headroom for large tb/H; < v7x physical
        ),
    )(x, w1, b1, w2, b2, w3, b3)

    return out[:B]


def init_params(key, num_inputs, num_actions, hidden_size,
                weight_dtype=jnp.bfloat16):
    """Mirrors the PyTorch module: kaiming_uniform_(nonlinearity='relu') on the
    weights (gain sqrt(2), bound = sqrt(6/fan_in)), default Linear bias init
    U(-1/sqrt(fan_in), 1/sqrt(fan_in)).  Weights stored (in, out); w3 stored as
    an (H, 1) column."""
    din = num_inputs + num_actions
    H = hidden_size
    keys = jax.random.split(key, 6)

    def kaiming_uniform(k, fan_in, shape):
        bound = jnp.sqrt(2.0) * jnp.sqrt(3.0 / fan_in)   # relu gain
        return jax.random.uniform(k, shape, jnp.float32, -bound, bound)

    def bias_init(k, fan_in, shape):
        bound = 1.0 / jnp.sqrt(fan_in)
        return jax.random.uniform(k, shape, jnp.float32, -bound, bound)

    w1 = kaiming_uniform(keys[0], din, (din, H)).astype(weight_dtype)
    b1 = bias_init(keys[1], din, (1, H))
    w2 = kaiming_uniform(keys[2], H, (H, H)).astype(weight_dtype)
    b2 = bias_init(keys[3], H, (1, H))
    w3 = kaiming_uniform(keys[4], H, (H, 1)).astype(weight_dtype)
    b3 = bias_init(keys[5], H, (1, 1))
    return (w1, b1, w2, b2, w3, b3)


if __name__ == "__main__":
    num_inputs, num_actions, hidden_size = 16, 4, 32
    batch = 2

    key = jax.random.PRNGKey(0)
    k_state, k_action, k_params = jax.random.split(key, 3)

    state = jax.random.normal(k_state, (batch, num_inputs), jnp.float32)
    action = jax.random.normal(k_action, (batch, num_actions), jnp.float32)
    params = init_params(k_params, num_inputs, num_actions, hidden_size)

    q = soft_q_forward(state, action, params)
    jax.block_until_ready(q)
    assert q.shape == (batch, 1)

    # Pure-JAX reference with the same bf16-weight / f32-accumulate recipe.
    w1, b1, w2, b2, w3, b3 = params
    x = jnp.concatenate([state, action], axis=1)
    h1 = jnp.maximum(
        jnp.dot(x.astype(jnp.bfloat16), w1, preferred_element_type=jnp.float32) + b1, 0.0)
    h2 = jnp.maximum(
        jnp.dot(h1.astype(jnp.bfloat16), w2, preferred_element_type=jnp.float32) + b2, 0.0)
    ref = jnp.dot(h2.astype(jnp.bfloat16), w3, preferred_element_type=jnp.float32) + b3

    assert jnp.allclose(q, ref, atol=2e-2, rtol=2e-2), (q, ref)
    print("KERNEL_OK")
</pallas_src>

<mosaic_0001>
module attributes {stable_mosaic.version = 11 : i64} {
  func.func @_softq_kernel(%arg0: i32, %arg1: memref<128x20xf32, #tpu.memory_space<vmem>>, %arg2: memref<20x128xbf16, #tpu.memory_space<vmem>>, %arg3: memref<1x128xf32, #tpu.memory_space<vmem>>, %arg4: memref<128x128xbf16, #tpu.memory_space<vmem>>, %arg5: memref<1x128xf32, #tpu.memory_space<vmem>>, %arg6: memref<128x1xbf16, #tpu.memory_space<vmem>>, %arg7: memref<1x1xf32, #tpu.memory_space<smem>>, %arg8: memref<128x1xf32, #tpu.memory_space<vmem>>) attributes {dimension_semantics = [#tpu.dimension_semantics<parallel>], iteration_bounds = array<i64: 1>, scalar_prefetch = 0 : i64, scratch_operands = 0 : i64, tpu.core_type = #tpu.core_type<tc>, window_params = [{transform_indices = @transform_0, window_bounds = array<i64: 128, 20>}, {pipeline_mode = #tpu.pipeline_mode<synchronous>, transform_indices = @transform_1, window_bounds = array<i64: 20, 128>}, {pipeline_mode = #tpu.pipeline_mode<synchronous>, transform_indices = @transform_2, window_bounds = array<i64: 1, 128>}, {pipeline_mode = #tpu.pipeline_mode<synchronous>, transform_indices = @transform_3, window_bounds = array<i64: 128, 128>}, {pipeline_mode = #tpu.pipeline_mode<synchronous>, transform_indices = @transform_4, window_bounds = array<i64: 1, 128>}, {pipeline_mode = #tpu.pipeline_mode<synchronous>, transform_indices = @transform_5, window_bounds = array<i64: 128, 1>}, {transform_indices = @transform_6, window_bounds = array<i64: 1, 1>}, {transform_indices = @transform_7, window_bounds = array<i64: 128, 1>}]} {
    %c0 = arith.constant 0 : index
    %c0_0 = arith.constant 0 : index
    %0 = vector.load %arg1[%c0, %c0_0] : memref<128x20xf32, #tpu.memory_space<vmem>>, vector<128x20xf32>
    %1 = arith.truncf %0 : vector<128x20xf32> to vector<128x20xbf16>
    %c0_1 = arith.constant 0 : index
    %c0_2 = arith.constant 0 : index
    %2 = vector.load %arg2[%c0_1, %c0_2] : memref<20x128xbf16, #tpu.memory_space<vmem>>, vector<20x128xbf16>
    %cst = arith.constant dense<0.000000e+00> : vector<128x128xf32>
    %3 = tpu.matmul %1, %2, %cst {dimension_numbers = #tpu.dot_dimension_numbers<[1], [0], [0], [1], [0, 0, 1, 1], [], []>} : vector<128x20xbf16>, vector<20x128xbf16>, vector<128x128xf32> -> vector<128x128xf32>
    %c0_3 = arith.constant 0 : index
    %c0_4 = arith.constant 0 : index
    %4 = vector.load %arg3[%c0_3, %c0_4] : memref<1x128xf32, #tpu.memory_space<vmem>>, vector<1x128xf32>
    %5 = vector.broadcast %4 : vector<1x128xf32> to vector<128x128xf32>
    %6 = arith.addf %3, %5 : vector<128x128xf32>
    %cst_5 = arith.constant 0.000000e+00 : f32
    %7 = vector.broadcast %cst_5 : f32 to vector<128x128xf32>
    %8 = arith.maximumf %6, %7 : vector<128x128xf32>
    %9 = arith.truncf %8 : vector<128x128xf32> to vector<128x128xbf16>
    %c0_6 = arith.constant 0 : index
    %c0_7 = arith.constant 0 : index
    %10 = vector.load %arg4[%c0_6, %c0_7] : memref<128x128xbf16, #tpu.memory_space<vmem>>, vector<128x128xbf16>
    %cst_8 = arith.constant dense<0.000000e+00> : vector<128x128xf32>
    %11 = tpu.matmul %9, %10, %cst_8 {dimension_numbers = #tpu.dot_dimension_numbers<[1], [0], [0], [1], [0, 0, 1, 1], [], []>} : vector<128x128xbf16>, vector<128x128xbf16>, vector<128x128xf32> -> vector<128x128xf32>
    %c0_9 = arith.constant 0 : index
    %c0_10 = arith.constant 0 : index
    %12 = vector.load %arg5[%c0_9, %c0_10] : memref<1x128xf32, #tpu.memory_space<vmem>>, vector<1x128xf32>
    %13 = vector.broadcast %12 : vector<1x128xf32> to vector<128x128xf32>
    %14 = arith.addf %11, %13 : vector<128x128xf32>
    %cst_11 = arith.constant 0.000000e+00 : f32
    %15 = vector.broadcast %cst_11 : f32 to vector<128x128xf32>
    %16 = arith.maximumf %14, %15 : vector<128x128xf32>
    %17 = arith.truncf %16 : vector<128x128xf32> to vector<128x128xbf16>
    %c0_12 = arith.constant 0 : index
    %c0_13 = arith.constant 0 : index
    %18 = vector.load %arg6[%c0_12, %c0_13] : memref<128x1xbf16, #tpu.memory_space<vmem>>, vector<128x1xbf16>
    %cst_14 = arith.constant dense<0.000000e+00> : vector<128x1xf32>
    %19 = tpu.matmul %17, %18, %cst_14 {dimension_numbers = #tpu.dot_dimension_numbers<[1], [0], [0], [1], [0, 0, 1, 1], [], []>} : vector<128x128xbf16>, vector<128x1xbf16>, vector<128x1xf32> -> vector<128x1xf32>
    %c0_15 = arith.constant 0 : index
    %c0_16 = arith.constant 0 : index
    %20 = memref.load %arg7[%c0_15, %c0_16] : memref<1x1xf32, #tpu.memory_space<smem>>
    %21 = vector.broadcast %20 : f32 to vector<128x1xf32>
    %22 = arith.addf %19, %21 : vector<128x1xf32>
    %c0_17 = arith.constant 0 : index
    %c0_18 = arith.constant 0 : index
    %23 = vector.load %arg8[%c0_17, %c0_18] : memref<128x1xf32, #tpu.memory_space<vmem>>, vector<128x1xf32>
    tpu.vector_store %arg8[%c0_17, %c0_18], %22 {strides = array<i32>} : memref<128x1xf32, #tpu.memory_space<vmem>>, vector<128x1xf32>,
    return
  }
  func.func @transform_0(%arg0: i32) -> (i32, i32) {
    %c0_i32 = arith.constant 0 : i32
    %c0_i32_0 = arith.constant 0 : i32
    return %arg0, %c0_i32 : i32, i32
  }
  func.func @transform_1(%arg0: i32) -> (i32, i32) {
    %c0_i32 = arith.constant 0 : i32
    %c0_i32_0 = arith.constant 0 : i32
    %c0_i32_1 = arith.constant 0 : i32
    return %c0_i32, %c0_i32_0 : i32, i32
  }
  func.func @transform_2(%arg0: i32) -> (i32, i32) {
    %c0_i32 = arith.constant 0 : i32
    %c0_i32_0 = arith.constant 0 : i32
    %c0_i32_1 = arith.constant 0 : i32
    return %c0_i32, %c0_i32_0 : i32, i32
  }
  func.func @transform_3(%arg0: i32) -> (i32, i32) {
    %c0_i32 = arith.constant 0 : i32
    %c0_i32_0 = arith.constant 0 : i32
    %c0_i32_1 = arith.constant 0 : i32
    return %c0_i32, %c0_i32_0 : i32, i32
  }
  func.func @transform_4(%arg0: i32) -> (i32, i32) {
    %c0_i32 = arith.constant 0 : i32
    %c0_i32_0 = arith.constant 0 : i32
    %c0_i32_1 = arith.constant 0 : i32
    return %c0_i32, %c0_i32_0 : i32, i32
  }
  func.func @transform_5(%arg0: i32) -> (i32, i32) {
    %c0_i32 = arith.constant 0 : i32
    %c0_i32_0 = arith.constant 0 : i32
    %c0_i32_1 = arith.constant 0 : i32
    return %c0_i32, %c0_i32_0 : i32, i32
  }
  func.func @transform_6(%arg0: i32) -> (i32, i32) {
    %c0_i32 = arith.constant 0 : i32
    %c0_i32_0 = arith.constant 0 : i32
    %c0_i32_1 = arith.constant 0 : i32
    return %c0_i32, %c0_i32_0 : i32, i32
  }
  func.func @transform_7(%arg0: i32) -> (i32, i32) {
    %c0_i32 = arith.constant 0 : i32
    %c0_i32_0 = arith.constant 0 : i32
    return %arg0, %c0_i32 : i32, i32
  }
}

</mosaic_0001>

<llo_original>
// kernel: tpu_custom_call.1
$region0: #{tpu_custom_call.1}
  #allocation0 [shape = 'u32[]', space=smem, size = 0x4, offset = 0x4, fixed_abs, tag = 'smem constant byte address 0x4 - core index']
  #allocation1 [shape = 'u32[144,128]{1,0:T(1,128)}', space=vmem, size = 0x12000, scoped, tag = 'internal scratch']
  #allocation2 [shape = 'f32[1,1]{1,0:T(1,128)S(6)}', space=smem, size = 0x200, scoped, tag = 'scoped memory for tpu_custom_call.1']
  %s0 = inlined_call_operand.vmem [shape: f32[128,20], index: 0, kind: input, shape index: {}]
  %s1 = inlined_call_operand.vmem [shape: bf16[20,128], index: 1, kind: input, shape index: {}]
  %s2 = inlined_call_operand.vmem [shape: f32[1,128], index: 2, kind: input, shape index: {}]
  %s3 = inlined_call_operand.vmem [shape: bf16[128,128], index: 3, kind: input, shape index: {}]
  %s4 = inlined_call_operand.vmem [shape: f32[1,128], index: 4, kind: input, shape index: {}]
  %s5 = inlined_call_operand.vmem [shape: bf16[128,1], index: 5, kind: input, shape index: {}]
  %s6 = inlined_call_operand.<no memory space> [shape: f32[1,1], index: 6, kind: input, shape index: {}]
  %s7 = inlined_call_operand.vmem [shape: f32[128,1], index: 7, kind: output, shape index: {}]
  %s8 = sld [smem:[#allocation0]]
  $region38: #{tpu_custom_call.1} parent=0
    _
  %s10 = ssub.s32 1, %s8
  %s11 = scalar_select 0, %s10, %s8
  %12 = sst [smem:[#allocation2]] %s6
  // Predicated region
  $region2: #{tpu_custom_call.1} parent=0 // pred_check
    _
  $region3: #{tpu_custom_call.1} parent=0 // pred_check_branch
    %14 = sbr.rel (0) target = $region5
  $region4: #{tpu_custom_call.1} parent=0 // pred_region
    _
  $region5: #{tpu_custom_call.1} parent=0 // pred_fallthru
    _
  // Predicated region
  $region6: #{tpu_custom_call.1} parent=0 // pred_check
    _
  $region7: #{tpu_custom_call.1} parent=0 // pred_check_branch
    %16 = sbr.rel (0) target = $region9
  $region8: #{tpu_custom_call.1} parent=0 // pred_region
    _
  $region9: #{tpu_custom_call.1} parent=0 // pred_fallthru
    _
  // Predicated region
  $region10: #{tpu_custom_call.1} parent=0 // pred_check
    _
  $region11: #{tpu_custom_call.1} parent=0 // pred_check_branch
    %18 = sbr.rel (0) target = $region13
  $region12: #{tpu_custom_call.1} parent=0 // pred_region
    _
  $region13: #{tpu_custom_call.1} parent=0 // pred_fallthru
    _
  // Predicated region
  $region14: #{tpu_custom_call.1} parent=0 // pred_check
    _
  $region15: #{tpu_custom_call.1} parent=0 // pred_check_branch
    %20 = sbr.rel (0) target = $region17
  $region16: #{tpu_custom_call.1} parent=0 // pred_region
    _
  $region17: #{tpu_custom_call.1} parent=0 // pred_fallthru
    _
  // Predicated region
  $region18: #{tpu_custom_call.1} parent=0 // pred_check
    _
  $region19: #{tpu_custom_call.1} parent=0 // pred_check_branch
    %22 = sbr.rel (0) target = $region21
  $region20: #{tpu_custom_call.1} parent=0 // pred_region
    _
  $region21: #{tpu_custom_call.1} parent=0 // pred_fallthru
    _
  // Predicated region
  $region22: #{tpu_custom_call.1} parent=0 // pred_check
    _
  $region23: #{tpu_custom_call.1} parent=0 // pred_check_branch
    %24 = sbr.rel (0) target = $region25
  $region24: #{tpu_custom_call.1} parent=0 // pred_region
    _
  $region25: #{tpu_custom_call.1} parent=0 // pred_fallthru
    _
  // Predicated region
  $region26: #{tpu_custom_call.1} parent=0 // pred_check
    _
  $region27: #{tpu_custom_call.1} parent=0 // pred_check_branch
    %26 = sbr.rel (0) target = $region29
  $region28: #{tpu_custom_call.1} parent=0 // pred_region
    _
  $region29: #{tpu_custom_call.1} parent=0 // pred_fallthru
    _
  %v28 = vld [vmem:[%s0] sm:$0xff]
  %v29 = vld [vmem:[%s0 + $0x8] sm:$0xff]
  %v30 = vld [vmem:[%s0 + $0x10] sm:$0xff]
  %v31 = vld [vmem:[%s0 + $0x18] sm:$0xff]
  %v32 = vld [vmem:[%s0 + $0x20] sm:$0xff]
  %v33 = vld [vmem:[%s0 + $0x28] sm:$0xff]
  %v34 = vld [vmem:[%s0 + $0x30] sm:$0xff]
  %v35 = vld [vmem:[%s0 + $0x38] sm:$0xff]
  %v36 = vld [vmem:[%s0 + $0x40] sm:$0xff]
  %v37 = vld [vmem:[%s0 + $0x48] sm:$0xff]
  %v38 = vld [vmem:[%s0 + $0x50] sm:$0xff]
  %v39 = vld [vmem:[%s0 + $0x58] sm:$0xff]
  %v40 = vld [vmem:[%s0 + $0x60] sm:$0xff]
  %v41 = vld [vmem:[%s0 + $0x68] sm:$0xff]
  %v42 = vld [vmem:[%s0 + $0x70] sm:$0xff]
  %v43 = vld [vmem:[%s0 + $0x78] sm:$0xff]
  %v44 = vpack.c.bf16 %v29, %v28
  %v45 = vpack.c.bf16 %v31, %v30
  %v46 = vpack.c.bf16 %v33, %v32
  %v47 = vpack.c.bf16 %v35, %v34
  %v48 = vpack.c.bf16 %v37, %v36
  %v49 = vpack.c.bf16 %v39, %v38
  %v50 = vpack.c.bf16 %v41, %v40
  %v51 = vpack.c.bf16 %v43, %v42
  %v52 = vld [vmem:[%s1] sm:$0xf]
  %v53 = vld [vmem:[%s1 + $0x4] sm:$0xf]
  %v54 = vld [vmem:[%s1 + $0x8] sm:$0x3]
  %v55 = vld [vmem:[%s2] sm:$0x1]
  %v57 = vlaneseq
  %v58 = vshrl.u32 %v57, 7
  %v59 = vsub.s32 0, %v58
  %v60 = vrot.slane %v55, %v59
  %v65 = vunpack.c.l.b16 %v52
  %v66 = vunpack.c.l.b16 %v53
  %v67 = vunpack.c.l.b16 %v54
  %v68 = vpack.c.b16 %v66, %v65
  %v69 = vpack.c.b16 %v67, %v67
  %vm71 = vcmask 162816
  %v73 = vsel %vm71, %v44, 0
  %v76 = vsel %vm71, %v45, 0
  %v79 = vsel %vm71, %v46, 0
  %v82 = vsel %vm71, %v47, 0
  %v85 = vsel %vm71, %v48, 0
  %v88 = vsel %vm71, %v49, 0
  %v91 = vsel %vm71, %v50, 0
  %v94 = vsel %vm71, %v51, 0
  %vm96 = vcmask 1041408
  %v98 = vsel %vm96, %v69, 0
  %100 = vmatprep.subr.bf16.mxu0 0
  %101 = vmatpush1.bf16.msra.mxu0 %v68
  %102 = vmatprep.subr.bf16.mxu0 0
  %103 = vmatpush1.bf16.msra.mxu0 %v98
  %104 = vmatprep.subr.bf16.mxu0 0
  %105 = vmatpush1.bf16.msra.mxu0 0
  %106 = vmatprep.subr.bf16.mxu0 0
  %107 = vmatpush1.bf16.msra.mxu0 0
  %108 = vmatprep.subr.bf16.mxu0 0
  %109 = vmatpush1.bf16.msra.mxu0 0
  %110 = vmatprep.subr.bf16.mxu0 0
  %111 = vmatpush1.bf16.msra.mxu0 0
  %112 = vmatprep.subr.bf16.mxu0 0
  %113 = vmatpush1.bf16.msra.mxu0 0
  %114 = vmatprep.subr.bf16.mxu0 0
  %115 = vmatpush1.bf16.msra.mxu0 0
  %116 = vmatprep.subr.bf16.mxu0 0
  %117 = vmatpush1.bf16.msra.mxu0 0
  %118 = vmatprep.subr.bf16.mxu0 0
  %119 = vmatpush1.bf16.msra.mxu0 0
  %120 = vmatprep.subr.bf16.mxu0 0
  %121 = vmatpush1.bf16.msra.mxu0 0
  %122 = vmatprep.subr.bf16.mxu0 0
  %123 = vmatpush1.bf16.msra.mxu0 0
  %124 = vmatprep.subr.bf16.mxu0 0
  %125 = vmatpush1.bf16.msra.mxu0 0
  %126 = vmatprep.subr.bf16.mxu0 0
  %127 = vmatpush1.bf16.msra.mxu0 0
  %128 = vmatprep.subr.bf16.mxu0 0
  %129 = vmatpush1.bf16.msra.mxu0 0
  %130 = vmatprep.subr.bf16.mxu0 0
  %131 = vmatpush1.bf16.msra.mxu0 0
  %132 = vmatprep.mubr.bf16.mxu0 0
  %133 = vmatmul.mubr.bf16.gmra.mrb[0].mxu0 %v73
  %v134 = vpop.f32.mrb[0].mxu0
  %v135 = vadd.f32 %v60, %v134
  %v136 = vpop.f32.mrb[0].mxu0
  %v137 = vpop.f32.mrb[0].mxu0
  %v138 = vadd.f32 %v60, %v137
  %v139 = vpop.f32.mrb[0].mxu0
  %140 = vmatprep.mubr.bf16.mxu0 0
  %141 = vmatmul.mubr.bf16.gmra.mrb[0].mxu0 %v76
  %v142 = vpop.f32.mrb[0].mxu0
  %v143 = vadd.f32 %v60, %v142
  %v144 = vpop.f32.mrb[0].mxu0
  %v145 = vpop.f32.mrb[0].mxu0
  %v146 = vadd.f32 %v60, %v145
  %v147 = vpop.f32.mrb[0].mxu0
  %148 = vmatprep.mubr.bf16.mxu0 0
  %149 = vmatmul.mubr.bf16.gmra.mrb[0].mxu0 %v79
  %v150 = vpop.f32.mrb[0].mxu0
  %v151 = vadd.f32 %v60, %v150
  %v152 = vpop.f32.mrb[0].mxu0
  %v153 = vpop.f32.mrb[0].mxu0
  %v154 = vadd.f32 %v60, %v153
  %v155 = vpop.f32.mrb[0].mxu0
  %156 = vmatprep.mubr.bf16.mxu0 0
  %157 = vmatmul.mubr.bf16.gmra.mrb[0].mxu0 %v82
  %v158 = vpop.f32.mrb[0].mxu0
  %v159 = vadd.f32 %v60, %v158
  %v160 = vpop.f32.mrb[0].mxu0
  %v161 = vpop.f32.mrb[0].mxu0
  %v162 = vadd.f32 %v60, %v161
  %v163 = vpop.f32.mrb[0].mxu0
  %164 = vmatprep.mubr.bf16.mxu0 0
  %165 = vmatmul.mubr.bf16.gmra.mrb[0].mxu0 %v85
  %v166 = vpop.f32.mrb[0].mxu0
  %v167 = vadd.f32 %v60, %v166
  %v168 = vpop.f32.mrb[0].mxu0
  %v169 = vpop.f32.mrb[0].mxu0
  %v170 = vadd.f32 %v60, %v169
  %v171 = vpop.f32.mrb[0].mxu0
  %172 = vmatprep.mubr.bf16.mxu0 0
  %173 = vmatmul.mubr.bf16.gmra.mrb[0].mxu0 %v88
  %v174 = vpop.f32.mrb[0].mxu0
  %v175 = vadd.f32 %v60, %v174
  %v176 = vpop.f32.mrb[0].mxu0
  %v177 = vpop.f32.mrb[0].mxu0
  %v178 = vadd.f32 %v60, %v177
  %v179 = vpop.f32.mrb[0].mxu0
  %180 = vmatprep.mubr.bf16.mxu0 0
  %181 = vmatmul.mubr.bf16.gmra.mrb[0].mxu0 %v91
  %v182 = vpop.f32.mrb[0].mxu0
  %v183 = vadd.f32 %v60, %v182
  %v184 = vpop.f32.mrb[0].mxu0
  %v185 = vpop.f32.mrb[0].mxu0
  %v186 = vadd.f32 %v60, %v185
  %v187 = vpop.f32.mrb[0].mxu0
  %188 = vmatprep.mubr.bf16.mxu0 0
  %189 = vmatmul.mubr.bf16.gmra.mrb[0].mxu0 %v94
  %v190 = vpop.f32.mrb[0].mxu0
  %v191 = vadd.f32 %v60, %v190
  %v192 = vpop.f32.mrb[0].mxu0
  %v193 = vpop.f32.mrb[0].mxu0
  %v194 = vadd.f32 %v60, %v193
  %v195 = vpop.f32.mrb[0].mxu0
  %196 = vdwg.mxu0
  %v197 = vmax.f32 %v135, 0.0
  %v198 = vmax.f32 %v138, 0.0
  %v199 = vmax.f32 %v143, 0.0
  %v200 = vmax.f32 %v146, 0.0
  %v201 = vmax.f32 %v151, 0.0
  %v202 = vmax.f32 %v154, 0.0
  %v203 = vmax.f32 %v159, 0.0
  %v204 = vmax.f32 %v162, 0.0
  %v205 = vmax.f32 %v167, 0.0
  %v206 = vmax.f32 %v170, 0.0
  %v207 = vmax.f32 %v175, 0.0
  %v208 = vmax.f32 %v178, 0.0
  %v209 = vmax.f32 %v183, 0.0
  %v210 = vmax.f32 %v186, 0.0
  %v211 = vmax.f32 %v191, 0.0
  %v212 = vmax.f32 %v194, 0.0
  %v213 = vpack.c.bf16 %v198, %v197
  %v214 = vpack.c.bf16 %v200, %v199
  %v215 = vpack.c.bf16 %v202, %v201
  %v216 = vpack.c.bf16 %v204, %v203
  %v217 = vpack.c.bf16 %v206, %v205
  %v218 = vpack.c.bf16 %v208, %v207
  %v219 = vpack.c.bf16 %v210, %v209
  %v220 = vpack.c.bf16 %v212, %v211
  %v221 = vld [vmem:[%s3] sm:$0xf]
  %v222 = vld [vmem:[%s3 + $0x4] sm:$0xf]
  %v223 = vld [vmem:[%s3 + $0x8] sm:$0xf]
  %v224 = vld [vmem:[%s3 + $0xc] sm:$0xf]
  %v225 = vld [vmem:[%s3 + $0x10] sm:$0xf]
  %v226 = vld [vmem:[%s3 + $0x14] sm:$0xf]
  %v227 = vld [vmem:[%s3 + $0x18] sm:$0xf]
  %v228 = vld [vmem:[%s3 + $0x1c] sm:$0xf]
  %v229 = vld [vmem:[%s3 + $0x20] sm:$0xf]
  %v230 = vld [vmem:[%s3 + $0x24] sm:$0xf]
  %v231 = vld [vmem:[%s3 + $0x28] sm:$0xf]
  %v232 = vld [vmem:[%s3 + $0x2c] sm:$0xf]
  %v233 = vld [vmem:[%s3 + $0x30] sm:$0xf]
  %v234 = vld [vmem:[%s3 + $0x34] sm:$0xf]
  %v235 = vld [vmem:[%s3 + $0x38] sm:$0xf]
  %v236 = vld [vmem:[%s3 + $0x3c] sm:$0xf]
  %v237 = vld [vmem:[%s4] sm:$0x1]
  %v239 = vlaneseq
  %v240 = vshrl.u32 %v239, 7
  %v241 = vsub.s32 0, %v240
  %v242 = vrot.slane %v237, %v241
  %v260 = vunpack.c.l.b16 %v221
  %v261 = vunpack.c.l.b16 %v222
  %v262 = vunpack.c.l.b16 %v223
  %v263 = vunpack.c.l.b16 %v224
  %v264 = vunpack.c.l.b16 %v225
  %v265 = vunpack.c.l.b16 %v226
  %v266 = vunpack.c.l.b16 %v227
  %v267 = vunpack.c.l.b16 %v228
  %v268 = vunpack.c.l.b16 %v229
  %v269 = vunpack.c.l.b16 %v230
  %v270 = vunpack.c.l.b16 %v231
  %v271 = vunpack.c.l.b16 %v232
  %v272 = vunpack.c.l.b16 %v233
  %v273 = vunpack.c.l.b16 %v234
  %v274 = vunpack.c.l.b16 %v235
  %v275 = vunpack.c.l.b16 %v236
  %v276 = vpack.c.b16 %v261, %v260
  %v277 = vpack.c.b16 %v263, %v262
  %v278 = vpack.c.b16 %v265, %v264
  %v279 = vpack.c.b16 %v267, %v266
  %v280 = vpack.c.b16 %v269, %v268
  %v281 = vpack.c.b16 %v271, %v270
  %v282 = vpack.c.b16 %v273, %v272
  %v283 = vpack.c.b16 %v275, %v274
  %292 = vmatprep.subr.bf16.mxu0 0
  %293 = vmatpush1.bf16.msra.mxu0 %v276
  %294 = vmatprep.subr.bf16.mxu0 0
  %295 = vmatpush1.bf16.msra.mxu0 %v277
  %296 = vmatprep.subr.bf16.mxu0 0
  %297 = vmatpush1.bf16.msra.mxu0 %v278
  %298 = vmatprep.subr.bf16.mxu0 0
  %299 = vmatpush1.bf16.msra.mxu0 %v279
  %300 = vmatprep.subr.bf16.mxu0 0
  %301 = vmatpush1.bf16.msra.mxu0 %v280
  %302 = vmatprep.subr.bf16.mxu0 0
  %303 = vmatpush1.bf16.msra.mxu0 %v281
  %304 = vmatprep.subr.bf16.mxu0 0
  %305 = vmatpush1.bf16.msra.mxu0 %v282
  %306 = vmatprep.subr.bf16.mxu0 0
  %307 = vmatpush1.bf16.msra.mxu0 %v283
  %308 = vmatprep.subr.bf16.mxu0 0
  %309 = vmatpush1.bf16.msra.mxu0 0
  %310 = vmatprep.subr.bf16.mxu0 0
  %311 = vmatpush1.bf16.msra.mxu0 0
  %312 = vmatprep.subr.bf16.mxu0 0
  %313 = vmatpush1.bf16.msra.mxu0 0
  %314 = vmatprep.subr.bf16.mxu0 0
  %315 = vmatpush1.bf16.msra.mxu0 0
  %316 = vmatprep.subr.bf16.mxu0 0
  %317 = vmatpush1.bf16.msra.mxu0 0
  %318 = vmatprep.subr.bf16.mxu0 0
  %319 = vmatpush1.bf16.msra.mxu0 0
  %320 = vmatprep.subr.bf16.mxu0 0
  %321 = vmatpush1.bf16.msra.mxu0 0
  %322 = vmatprep.subr.bf16.mxu0 0
  %323 = vmatpush1.bf16.msra.mxu0 0
  %324 = vmatprep.mubr.bf16.mxu0 0
  %325 = vmatmul.mubr.bf16.gmra.mrb[0].mxu0 %v213
  %v326 = vpop.f32.mrb[0].mxu0
  %v327 = vadd.f32 %v242, %v326
  %v328 = vpop.f32.mrb[0].mxu0
  %v329 = vpop.f32.mrb[0].mxu0
  %v330 = vadd.f32 %v242, %v329
  %v331 = vpop.f32.mrb[0].mxu0
  %332 = vmatprep.mubr.bf16.mxu0 0
  %333 = vmatmul.mubr.bf16.gmra.mrb[0].mxu0 %v214
  %v334 = vpop.f32.mrb[0].mxu0
  %v335 = vadd.f32 %v242, %v334
  %v336 = vpop.f32.mrb[0].mxu0
  %v337 = vpop.f32.mrb[0].mxu0
  %v338 = vadd.f32 %v242, %v337
  %v339 = vpop.f32.mrb[0].mxu0
  %340 = vmatprep.mubr.bf16.mxu0 0
  %341 = vmatmul.mubr.bf16.gmra.mrb[0].mxu0 %v215
  %v342 = vpop.f32.mrb[0].mxu0
  %v343 = vadd.f32 %v242, %v342
  %v344 = vpop.f32.mrb[0].mxu0
  %v345 = vpop.f32.mrb[0].mxu0
  %v346 = vadd.f32 %v242, %v345
  %v347 = vpop.f32.mrb[0].mxu0
  %348 = vmatprep.mubr.bf16.mxu0 0
  %349 = vmatmul.mubr.bf16.gmra.mrb[0].mxu0 %v216
  %v350 = vpop.f32.mrb[0].mxu0
  %v351 = vadd.f32 %v242, %v350
  %v352 = vpop.f32.mrb[0].mxu0
  %v353 = vpop.f32.mrb[0].mxu0
  %v354 = vadd.f32 %v242, %v353
  %v355 = vpop.f32.mrb[0].mxu0
  %356 = vmatprep.mubr.bf16.mxu0 0
  %357 = vmatmul.mubr.bf16.gmra.mrb[0].mxu0 %v217
  %v358 = vpop.f32.mrb[0].mxu0
  %v359 = vadd.f32 %v242, %v358
  %v360 = vpop.f32.mrb[0].mxu0
  %v361 = vpop.f32.mrb[0].mxu0
  %v362 = vadd.f32 %v242, %v361
  %v363 = vpop.f32.mrb[0].mxu0
  %364 = vmatprep.mubr.bf16.mxu0 0
  %365 = vmatmul.mubr.bf16.gmra.mrb[0].mxu0 %v218
  %v366 = vpop.f32.mrb[0].mxu0
  %v367 = vadd.f32 %v242, %v366
  %v368 = vpop.f32.mrb[0].mxu0
  %v369 = vpop.f32.mrb[0].mxu0
  %v370 = vadd.f32 %v242, %v369
  %v371 = vpop.f32.mrb[0].mxu0
  %372 = vmatprep.mubr.bf16.mxu0 0
  %373 = vmatmul.mubr.bf16.gmra.mrb[0].mxu0 %v219
  %v374 = vpop.f32.mrb[0].mxu0
  %v375 = vadd.f32 %v242, %v374
  %v376 = vpop.f32.mrb[0].mxu0
  %v377 = vpop.f32.mrb[0].mxu0
  %v378 = vadd.f32 %v242, %v377
  %v379 = vpop.f32.mrb[0].mxu0
  %380 = vmatprep.mubr.bf16.mxu0 0
  %381 = vmatmul.mubr.bf16.gmra.mrb[0].mxu0 %v220
  %v382 = vpop.f32.mrb[0].mxu0
  %v383 = vadd.f32 %v242, %v382
  %v384 = vpop.f32.mrb[0].mxu0
  %v385 = vpop.f32.mrb[0].mxu0
  %v386 = vadd.f32 %v242, %v385
  %v387 = vpop.f32.mrb[0].mxu0
  %388 = vdwg.mxu0
  %v389 = vmax.f32 %v327, 0.0
  %v390 = vmax.f32 %v330, 0.0
  %v391 = vmax.f32 %v335, 0.0
  %v392 = vmax.f32 %v338, 0.0
  %v393 = vmax.f32 %v343, 0.0
  %v394 = vmax.f32 %v346, 0.0
  %v395 = vmax.f32 %v351, 0.0
  %v396 = vmax.f32 %v354, 0.0
  %v397 = vmax.f32 %v359, 0.0
  %v398 = vmax.f32 %v362, 0.0
  %v399 = vmax.f32 %v367, 0.0
  %v400 = vmax.f32 %v370, 0.0
  %v401 = vmax.f32 %v375, 0.0
  %v402 = vmax.f32 %v378, 0.0
  %v403 = vmax.f32 %v383, 0.0
  %v404 = vmax.f32 %v386, 0.0
  %v405 = vpack.c.bf16 %v390, %v389
  %v406 = vpack.c.bf16 %v392, %v391
  %v407 = vpack.c.bf16 %v394, %v393
  %v408 = vpack.c.bf16 %v396, %v395
  %v409 = vpack.c.bf16 %v398, %v397
  %v410 = vpack.c.bf16 %v400, %v399
  %v411 = vpack.c.bf16 %v402, %v401
  %v412 = vpack.c.bf16 %v404, %v403
  %v413 = vld [vmem:[%s5] sm:$0xf]
  %v414 = vld [vmem:[%s5 + $0x4] sm:$0xf]
  %v415 = vld [vmem:[%s5 + $0x8] sm:$0xf]
  %v416 = vld [vmem:[%s5 + $0xc] sm:$0xf]
  %v417 = vld [vmem:[%s5 + $0x10] sm:$0xf]
  %v418 = vld [vmem:[%s5 + $0x14] sm:$0xf]
  %v419 = vld [vmem:[%s5 + $0x18] sm:$0xf]
  %v420 = vld [vmem:[%s5 + $0x1c] sm:$0xf]
  %v421 = vld [vmem:[%s5 + $0x20] sm:$0xf]
  %v422 = vld [vmem:[%s5 + $0x24] sm:$0xf]
  %v423 = vld [vmem:[%s5 + $0x28] sm:$0xf]
  %v424 = vld [vmem:[%s5 + $0x2c] sm:$0xf]
  %v425 = vld [vmem:[%s5 + $0x30] sm:$0xf]
  %v426 = vld [vmem:[%s5 + $0x34] sm:$0xf]
  %v427 = vld [vmem:[%s5 + $0x38] sm:$0xf]
  %v428 = vld [vmem:[%s5 + $0x3c] sm:$0xf]
  %s429 = sld [smem:[#allocation2]]
  %v430 = vstv %s429
  %v447 = vunpack.c.l.b16 %v413
  %v448 = vunpack.c.l.b16 %v414
  %v449 = vunpack.c.l.b16 %v415
  %v450 = vunpack.c.l.b16 %v416
  %v451 = vunpack.c.l.b16 %v417
  %v452 = vunpack.c.l.b16 %v418
  %v453 = vunpack.c.l.b16 %v419
  %v454 = vunpack.c.l.b16 %v420
  %v455 = vunpack.c.l.b16 %v421
  %v456 = vunpack.c.l.b16 %v422
  %v457 = vunpack.c.l.b16 %v423
  %v458 = vunpack.c.l.b16 %v424
  %v459 = vunpack.c.l.b16 %v425
  %v460 = vunpack.c.l.b16 %v426
  %v461 = vunpack.c.l.b16 %v427
  %v462 = vunpack.c.l.b16 %v428
  %v463 = vpack.c.b16 %v448, %v447
  %v464 = vpack.c.b16 %v450, %v449
  %v465 = vpack.c.b16 %v452, %v451
  %v466 = vpack.c.b16 %v454, %v453
  %v467 = vpack.c.b16 %v456, %v455
  %v468 = vpack.c.b16 %v458, %v457
  %v469 = vpack.c.b16 %v460, %v459
  %v470 = vpack.c.b16 %v462, %v461
  %479 = vmatprep.subr.bf16.mxu0 0
  %480 = vmatpush1.bf16.msra.mxu0 %v463
  %481 = vmatprep.subr.bf16.mxu0 0
  %482 = vmatpush1.bf16.msra.mxu0 %v464
  %483 = vmatprep.subr.bf16.mxu0 0
  %484 = vmatpush1.bf16.msra.mxu0 %v465
  %485 = vmatprep.subr.bf16.mxu0 0
  %486 = vmatpush1.bf16.msra.mxu0 %v466
  %487 = vmatprep.subr.bf16.mxu0 0
  %488 = vmatpush1.bf16.msra.mxu0 %v467
  %489 = vmatprep.subr.bf16.mxu0 0
  %490 = vmatpush1.bf16.msra.mxu0 %v468
  %491 = vmatprep.subr.bf16.mxu0 0
  %492 = vmatpush1.bf16.msra.mxu0 %v469
  %493 = vmatprep.subr.bf16.mxu0 0
  %494 = vmatpush1.bf16.msra.mxu0 %v470
  %495 = vmatprep.subr.bf16.mxu0 0
  %496 = vmatpush1.bf16.msra.mxu0 0
  %497 = vmatprep.subr.bf16.mxu0 0
  %498 = vmatpush1.bf16.msra.mxu0 0
  %499 = vmatprep.subr.bf16.mxu0 0
  %500 = vmatpush1.bf16.msra.mxu0 0
  %501 = vmatprep.subr.bf16.mxu0 0
  %502 = vmatpush1.bf16.msra.mxu0 0
  %503 = vmatprep.subr.bf16.mxu0 0
  %504 = vmatpush1.bf16.msra.mxu0 0
  %505 = vmatprep.subr.bf16.mxu0 0
  %506 = vmatpush1.bf16.msra.mxu0 0
  %507 = vmatprep.subr.bf16.mxu0 0
  %508 = vmatpush1.bf16.msra.mxu0 0
  %509 = vmatprep.subr.bf16.mxu0 0
  %510 = vmatpush1.bf16.msra.mxu0 0
  %511 = vmatprep.mubr.bf16.mxu0 0
  %512 = vmatmul.mubr.bf16.gmra.mrb[0].mxu0 %v405
  %v513 = vpop.f32.mrb[0].mxu0
  %v514 = vadd.f32 %v430, %v513
  %v515 = vpop.f32.mrb[0].mxu0
  %v516 = vpop.f32.mrb[0].mxu0
  %v517 = vadd.f32 %v430, %v516
  %v518 = vpop.f32.mrb[0].mxu0
  %519 = vmatprep.mubr.bf16.mxu0 0
  %520 = vmatmul.mubr.bf16.gmra.mrb[0].mxu0 %v406
  %v521 = vpop.f32.mrb[0].mxu0
  %v522 = vadd.f32 %v430, %v521
  %v523 = vpop.f32.mrb[0].mxu0
  %v524 = vpop.f32.mrb[0].mxu0
  %v525 = vadd.f32 %v430, %v524
  %v526 = vpop.f32.mrb[0].mxu0
  %527 = vmatprep.mubr.bf16.mxu0 0
  %528 = vmatmul.mubr.bf16.gmra.mrb[0].mxu0 %v407
  %v529 = vpop.f32.mrb[0].mxu0
  %v530 = vadd.f32 %v430, %v529
  %v531 = vpop.f32.mrb[0].mxu0
  %v532 = vpop.f32.mrb[0].mxu0
  %v533 = vadd.f32 %v430, %v532
  %v534 = vpop.f32.mrb[0].mxu0
  %535 = vmatprep.mubr.bf16.mxu0 0
  %536 = vmatmul.mubr.bf16.gmra.mrb[0].mxu0 %v408
  %v537 = vpop.f32.mrb[0].mxu0
  %v538 = vadd.f32 %v430, %v537
  %v539 = vpop.f32.mrb[0].mxu0
  %v540 = vpop.f32.mrb[0].mxu0
  %v541 = vadd.f32 %v430, %v540
  %v542 = vpop.f32.mrb[0].mxu0
  %543 = vmatprep.mubr.bf16.mxu0 0
  %544 = vmatmul.mubr.bf16.gmra.mrb[0].mxu0 %v409
  %v545 = vpop.f32.mrb[0].mxu0
  %v546 = vadd.f32 %v430, %v545
  %v547 = vpop.f32.mrb[0].mxu0
  %v548 = vpop.f32.mrb[0].mxu0
  %v549 = vadd.f32 %v430, %v548
  %v550 = vpop.f32.mrb[0].mxu0
  %551 = vmatprep.mubr.bf16.mxu0 0
  %552 = vmatmul.mubr.bf16.gmra.mrb[0].mxu0 %v410
  %v553 = vpop.f32.mrb[0].mxu0
  %v554 = vadd.f32 %v430, %v553
  %v555 = vpop.f32.mrb[0].mxu0
  %v556 = vpop.f32.mrb[0].mxu0
  %v557 = vadd.f32 %v430, %v556
  %v558 = vpop.f32.mrb[0].mxu0
  %559 = vmatprep.mubr.bf16.mxu0 0
  %560 = vmatmul.mubr.bf16.gmra.mrb[0].mxu0 %v411
  %v561 = vpop.f32.mrb[0].mxu0
  %v562 = vadd.f32 %v430, %v561
  %v563 = vpop.f32.mrb[0].mxu0
  %v564 = vpop.f32.mrb[0].mxu0
  %v565 = vadd.f32 %v430, %v564
  %v566 = vpop.f32.mrb[0].mxu0
  %567 = vmatprep.mubr.bf16.mxu0 0
  %568 = vmatmul.mubr.bf16.gmra.mrb[0].mxu0 %v412
  %v569 = vpop.f32.mrb[0].mxu0
  %v570 = vadd.f32 %v430, %v569
  %v571 = vpop.f32.mrb[0].mxu0
  %v572 = vpop.f32.mrb[0].mxu0
  %v573 = vadd.f32 %v430, %v572
  %v574 = vpop.f32.mrb[0].mxu0
  %575 = vdwg.mxu0
  %vm576 = vcmask 7168
  %577 = vst.msk [vmem:[%s7] sm:$0xff] %vm576, %v514
  %578 = vst.msk [vmem:[%s7 + $0x8] sm:$0xff] %vm576, %v517
  %579 = vst.msk [vmem:[%s7 + $0x10] sm:$0xff] %vm576, %v522
  %580 = vst.msk [vmem:[%s7 + $0x18] sm:$0xff] %vm576, %v525
  %581 = vst.msk [vmem:[%s7 + $0x20] sm:$0xff] %vm576, %v530
  %582 = vst.msk [vmem:[%s7 + $0x28] sm:$0xff] %vm576, %v533
  %583 = vst.msk [vmem:[%s7 + $0x30] sm:$0xff] %vm576, %v538
  %584 = vst.msk [vmem:[%s7 + $0x38] sm:$0xff] %vm576, %v541
  %585 = vst.msk [vmem:[%s7 + $0x40] sm:$0xff] %vm576, %v546
  %586 = vst.msk [vmem:[%s7 + $0x48] sm:$0xff] %vm576, %v549
  %587 = vst.msk [vmem:[%s7 + $0x50] sm:$0xff] %vm576, %v554
  %588 = vst.msk [vmem:[%s7 + $0x58] sm:$0xff] %vm576, %v557
  %589 = vst.msk [vmem:[%s7 + $0x60] sm:$0xff] %vm576, %v562
  %590 = vst.msk [vmem:[%s7 + $0x68] sm:$0xff] %vm576, %v565
  %591 = vst.msk [vmem:[%s7 + $0x70] sm:$0xff] %vm576, %v570
  %592 = vst.msk [vmem:[%s7 + $0x78] sm:$0xff] %vm576, %v573
  // Predicated region
  $region30: #{tpu_custom_call.1} parent=0 // pred_check
    _
  $region31: #{tpu_custom_call.1} parent=0 // pred_check_branch
    %594 = sbr.rel (0) target = $region33
  $region32: #{tpu_custom_call.1} parent=0 // pred_region
    _
  $region33: #{tpu_custom_call.1} parent=0 // pred_fallthru
    _
  // Predicated region
  $region34: #{tpu_custom_call.1} parent=0 // pred_check
    _
  $region35: #{tpu_custom_call.1} parent=0 // pred_check_branch
    %596 = sbr.rel (0) target = $region37
  $region36: #{tpu_custom_call.1} parent=0 // pred_region
    _
  $region37: #{tpu_custom_call.1} parent=0 // pred_fallthru
    _

</llo_original>
